<compile_context>
chip_gen: v6e
topology: v6e:2x2x1
jax: 0.10.0
libtpu: 0.0.40
codegen_flags: <defaults>
</compile_context>

<pallas_src>
import functools

import jax
import jax.numpy as jnp
from jax.experimental import pallas as pl
from jax.experimental.pallas import tpu as pltpu


def _ddne_fused_kernel(x_ref, w_comb_ref, w_ihT_ref, b_gate_ref, b_hn_ref,
                       *rest, h_len, bsz, e, dec_acts):
    """Whole ddne forward in one kernel invocation.

    Inputs (VMEM):
      x_ref      : (h_len*B, N)  time-major flattened input slices
      w_comb_ref : (N, 3E)       W_emb @ W_ih^T          (folded once outside)
      w_ihT_ref  : (E, 3E)       GRU weight_ih^T, gate order [r | z | n]
      b_gate_ref : (1, 3E)       b_ih + [b_hr, b_hz, 0]  (folded once outside)
      b_hn_ref   : (1, E)        hidden bias of the n gate (needed for r*b_hn)
      then per decoder layer i:  W_i^T (in, out), b_i (1, out)
    Outputs (VMEM):
      out_ref : (B, decoders[-1])
      c_ref   : (B, 2*h_len*E) = [hl | hr]
    Scratch:
      gx_ref  : (h_len*B, 3E)  x-dependent gate pre-activations for all steps
    """
    n_dec = len(dec_acts)
    dec_refs = rest[:2 * n_dec]
    out_ref = rest[2 * n_dec]
    c_ref = rest[2 * n_dec + 1]
    gx_ref = rest[2 * n_dec + 2]

    # One big MXU matmul: x-dependent gate terms for ALL time steps, with the
    # r/z biases already folded into b_gate. Shared by both directions.
    gx_ref[...] = (jnp.dot(x_ref[...], w_comb_ref[...],
                           preferred_element_type=jnp.float32)
                   + b_gate_ref[...])

    w_ihT = w_ihT_ref[...]
    b_hn = b_hn_ref[...]

    def gru_from_gates(g):
        # torch.nn.GRU cell with h_{t-1} = 0  =>  h = (1 - z) * n
        r = jax.nn.sigmoid(g[:, 0:e])
        z = jax.nn.sigmoid(g[:, e:2 * e])
        n = jnp.tanh(g[:, 2 * e:3 * e] + r * b_hn)
        return (1.0 - z) * n

    def run_direction(order):
        # order[j] = time index feeding processing step j of this direction.
        acts = [gru_from_gates(gx_ref[pl.ds(order[0] * bsz, bsz), :])]
        for i in range(h_len - 1):
            # NOTE: torch code uses activations[i - 1]; for i == 0 Python's
            # negative indexing picks the last (== only) element. Reproduced.
            prev = acts[i - 1]
            g = (gx_ref[pl.ds(order[i + 1] * bsz, bsz), :]
                 + jnp.dot(prev, w_ihT, preferred_element_type=jnp.float32))
            acts.append(gru_from_gates(g))
        return acts

    acts_fwd = run_direction(tuple(range(h_len)))               # -> hr
    acts_rev = run_direction(tuple(range(h_len - 1, -1, -1)))   # -> hl

    # c = [hl | hr] written as column slices of the output slab.
    for j, a in enumerate(acts_rev + acts_fwd):
        c_ref[:, j * e:(j + 1) * e] = a

    # Fused decoder chain: Linear+ReLU ... Linear+Sigmoid, all in VMEM/vregs.
    y = c_ref[...]
    for li, act in enumerate(dec_acts):
        y = (jnp.dot(y, dec_refs[2 * li][...],
                     preferred_element_type=jnp.float32)
             + dec_refs[2 * li + 1][...])
        y = jnp.maximum(y, 0.0) if act == "relu" else jax.nn.sigmoid(y)
    out_ref[...] = y


def ddne_forward(params, x):
    """x: (h_len, B, 1, N) float32 — same indexing convention as torch forward."""
    h_len, bsz, _, num_nodes = x.shape
    e = params["w_emb"].shape[1]

    # One-time algebraic folds (outside the kernel):
    #   gates_x = x @ (W_emb @ W_ih^T);  b_gate = b_ih + [b_hr, b_hz, 0]
    w_comb = jnp.dot(params["w_emb"], params["w_ih_t"],
                     preferred_element_type=jnp.float32)           # (N, 3E)
    b_gate = params["b_ih"] + jnp.concatenate(
        [params["b_hh"][:, :2 * e], jnp.zeros((1, e), jnp.float32)], axis=1)
    b_hn = params["b_hh"][:, 2 * e:]

    x2d = x.reshape(h_len * bsz, num_nodes)                        # (h_len*B, N)

    dec = params["decoder"]
    dec_acts = tuple(act for _, _, act in dec)
    dec_flat = []
    for w_t, b, _ in dec:
        dec_flat += [w_t, b]
    out_dim = dec[-1][0].shape[1]

    vm = pl.BlockSpec(memory_space=pltpu.MemorySpace.VMEM)
    kernel = functools.partial(_ddne_fused_kernel, h_len=h_len, bsz=bsz, e=e,
                               dec_acts=dec_acts)
    output, c = pl.pallas_call(
        kernel,
        out_shape=(jax.ShapeDtypeStruct((bsz, out_dim), jnp.float32),
                   jax.ShapeDtypeStruct((bsz, 2 * h_len * e), jnp.float32)),
        in_specs=[vm] * (5 + len(dec_flat)),
        out_specs=(vm, vm),
        scratch_shapes=[pltpu.VMEM((h_len * bsz, 3 * e), jnp.float32)],
    )(x2d, w_comb, params["w_ih_t"], b_gate, b_hn, *dec_flat)
    return output, c


def make_params(key, num_nodes, encoder_dim, decoders, h_len):
    ks = jax.random.split(key, 4 + 2 * len(decoders))
    params = {
        # Embedding.weight ~ randn(num_nodes, encoder_dim)
        "w_emb": jax.random.normal(ks[0], (num_nodes, encoder_dim), jnp.float32),
        # GRU weight_ih_l0 is (3E, E) in torch; stored transposed (E, 3E).
        "w_ih_t": 0.1 * jax.random.normal(ks[1], (encoder_dim, 3 * encoder_dim),
                                          jnp.float32),
        "b_ih": 0.1 * jax.random.normal(ks[2], (1, 3 * encoder_dim), jnp.float32),
        "b_hh": 0.1 * jax.random.normal(ks[3], (1, 3 * encoder_dim), jnp.float32),
    }
    # Decoder: Linear(2*h_len*E -> decoders[0]) + ReLU, then Linear chain,
    # last activation Sigmoid, others ReLU (mirrors the nn.Sequential build).
    dec = []
    in_dim = 2 * h_len * encoder_dim
    for i, out_dim in enumerate(decoders):
        w_t = 0.1 * jax.random.normal(ks[4 + 2 * i], (in_dim, out_dim),
                                      jnp.float32)
        b = 0.1 * jax.random.normal(ks[5 + 2 * i], (1, out_dim), jnp.float32)
        act = "sigmoid" if i == len(decoders) - 1 else "relu"
        dec.append((w_t, b, act))
        in_dim = out_dim
    params["decoder"] = dec
    return params


def _reference_forward(params, x):
    """Pure-JAX mirror of the torch module (unfused, unfolded) for checking."""
    h_len = x.shape[0]
    e = params["w_emb"].shape[1]
    w_emb, w_ih_t = params["w_emb"], params["w_ih_t"]
    b_ih, b_hh = params["b_ih"], params["b_hh"]

    def gru_cell_h0(inp):                              # inp: (B, E)
        gates = inp @ w_ih_t + b_ih
        r = jax.nn.sigmoid(gates[:, :e] + b_hh[:, :e])
        z = jax.nn.sigmoid(gates[:, e:2 * e] + b_hh[:, e:2 * e])
        n = jnp.tanh(gates[:, 2 * e:] + r * b_hh[:, 2 * e:])
        return (1.0 - z) * n

    def encoding(seq):                                 # seq: (h_len, B, 1, N)
        acts = [gru_cell_h0(seq[0, :, 0, :] @ w_emb)]
        for i in range(h_len - 1):
            prev = acts[i - 1]
            acts.append(gru_cell_h0(prev + seq[i + 1, :, 0, :] @ w_emb))
        return jnp.concatenate(acts, axis=1)

    hr = encoding(x)
    hl = encoding(x[::-1])
    c = jnp.concatenate([hl, hr], axis=1)
    out = c
    for w_t, b, act in params["decoder"]:
        out = out @ w_t + b
        out = jnp.maximum(out, 0.0) if act == "relu" else jax.nn.sigmoid(out)
    return out, c


if __name__ == "__main__":
    # Small synthetic config consistent with the module:
    #   args.historical_len = 3, args.num_nodes = 8, encoder = 16,
    #   decoders = [32, 8]  (last == num_nodes)
    h_len, batch, num_nodes, encoder_dim = 3, 2, 8, 16
    decoders = [32, num_nodes]

    key = jax.random.PRNGKey(0)
    k_params, k_x = jax.random.split(key)
    params = make_params(k_params, num_nodes, encoder_dim, decoders, h_len)

    # Adjacency-like 0/1 input of shape (historical_len, B, 1, num_nodes).
    x = (jax.random.uniform(k_x, (h_len, batch, 1, num_nodes)) < 0.3).astype(
        jnp.float32)

    output, c = ddne_forward(params, x)
    jax.block_until_ready((output, c))

    assert output.shape == (batch, num_nodes)
    assert c.shape == (batch, 2 * h_len * encoder_dim)

    ref_out, ref_c = _reference_forward(params, x)
    assert jnp.allclose(c, ref_c, atol=1e-3, rtol=1e-3)
    assert jnp.allclose(output, ref_out, atol=1e-3, rtol=1e-3)
    print("KERNEL_OK")
</pallas_src>

<mosaic_0001>
module attributes {stable_mosaic.version = 11 : i64} {
  func.func @_ddne_fused_kernel(%arg0: memref<6x8xf32, #tpu.memory_space<vmem>>, %arg1: memref<8x48xf32, #tpu.memory_space<vmem>>, %arg2: memref<16x48xf32, #tpu.memory_space<vmem>>, %arg3: memref<1x48xf32, #tpu.memory_space<vmem>>, %arg4: memref<1x16xf32, #tpu.memory_space<vmem>>, %arg5: memref<96x32xf32, #tpu.memory_space<vmem>>, %arg6: memref<1x32xf32, #tpu.memory_space<vmem>>, %arg7: memref<32x8xf32, #tpu.memory_space<vmem>>, %arg8: memref<1x8xf32, #tpu.memory_space<vmem>>, %arg9: memref<2x8xf32, #tpu.memory_space<vmem>>, %arg10: memref<2x96xf32, #tpu.memory_space<vmem>>, %arg11: memref<6x48xf32, #tpu.memory_space<vmem>>) attributes {dimension_semantics = [], scalar_prefetch = 0 : i64, scratch_operands = 1 : i64, tpu.core_type = #tpu.core_type<tc>} {
    %c0 = arith.constant 0 : index
    %c0_0 = arith.constant 0 : index
    %0 = vector.load %arg0[%c0, %c0_0] : memref<6x8xf32, #tpu.memory_space<vmem>>, vector<6x8xf32>
    %c0_1 = arith.constant 0 : index
    %c0_2 = arith.constant 0 : index
    %1 = vector.load %arg1[%c0_1, %c0_2] : memref<8x48xf32, #tpu.memory_space<vmem>>, vector<8x48xf32>
    %cst = arith.constant dense<0.000000e+00> : vector<6x48xf32>
    %2 = tpu.matmul %0, %1, %cst {dimension_numbers = #tpu.dot_dimension_numbers<[1], [0], [0], [1], [0, 0, 1, 1], [], []>} : vector<6x8xf32>, vector<8x48xf32>, vector<6x48xf32> -> vector<6x48xf32>
    %c0_3 = arith.constant 0 : index
    %c0_4 = arith.constant 0 : index
    %3 = vector.load %arg3[%c0_3, %c0_4] : memref<1x48xf32, #tpu.memory_space<vmem>>, vector<1x48xf32>
    %4 = vector.broadcast %3 : vector<1x48xf32> to vector<6x48xf32>
    %5 = arith.addf %2, %4 : vector<6x48xf32>
    %c0_5 = arith.constant 0 : index
    %c0_6 = arith.constant 0 : index
    %6 = vector.load %arg11[%c0_5, %c0_6] : memref<6x48xf32, #tpu.memory_space<vmem>>, vector<6x48xf32>
    tpu.vector_store %arg11[%c0_5, %c0_6], %5 {strides = array<i32>} : memref<6x48xf32, #tpu.memory_space<vmem>>, vector<6x48xf32>,
    %c0_7 = arith.constant 0 : index
    %c0_8 = arith.constant 0 : index
    %7 = vector.load %arg2[%c0_7, %c0_8] : memref<16x48xf32, #tpu.memory_space<vmem>>, vector<16x48xf32>
    %c0_9 = arith.constant 0 : index
    %c0_10 = arith.constant 0 : index
    %8 = vector.load %arg4[%c0_9, %c0_10] : memref<1x16xf32, #tpu.memory_space<vmem>>, vector<1x16xf32>
    %c0_11 = arith.constant 0 : index
    %c0_12 = arith.constant 0 : index
    %9 = vector.load %arg11[%c0_11, %c0_12] : memref<6x48xf32, #tpu.memory_space<vmem>>, vector<2x48xf32>
    %10 = vector.extract_strided_slice %9 {offsets = [0, 0], sizes = [2, 16], strides = [1, 1]} : vector<2x48xf32> to vector<2x16xf32>
    %11 = arith.negf %10 : vector<2x16xf32>
    %12 = math.exp %11 : vector<2x16xf32>
    %cst_13 = arith.constant 1.000000e+00 : f32
    %13 = vector.broadcast %cst_13 : f32 to vector<2x16xf32>
    %14 = arith.addf %13, %12 : vector<2x16xf32>
    %15 = arith.divf %13, %14 : vector<2x16xf32>
    %16 = vector.extract_strided_slice %9 {offsets = [0, 16], sizes = [2, 16], strides = [1, 1]} : vector<2x48xf32> to vector<2x16xf32>
    %17 = arith.negf %16 : vector<2x16xf32>
    %18 = math.exp %17 : vector<2x16xf32>
    %cst_14 = arith.constant 1.000000e+00 : f32
    %19 = vector.broadcast %cst_14 : f32 to vector<2x16xf32>
    %20 = arith.addf %19, %18 : vector<2x16xf32>
    %21 = arith.divf %19, %20 : vector<2x16xf32>
    %22 = vector.extract_strided_slice %9 {offsets = [0, 32], sizes = [2, 16], strides = [1, 1]} : vector<2x48xf32> to vector<2x16xf32>
    %23 = vector.broadcast %8 : vector<1x16xf32> to vector<2x16xf32>
    %24 = arith.mulf %15, %23 : vector<2x16xf32>
    %25 = arith.addf %22, %24 : vector<2x16xf32>
    %26 = math.tanh %25 : vector<2x16xf32>
    %cst_15 = arith.constant 1.000000e+00 : f32
    %27 = vector.broadcast %cst_15 : f32 to vector<2x16xf32>
    %28 = arith.subf %27, %21 : vector<2x16xf32>
    %29 = arith.mulf %28, %26 : vector<2x16xf32>
    %c2 = arith.constant 2 : index
    %c0_16 = arith.constant 0 : index
    %30 = vector.load %arg11[%c2, %c0_16] : memref<6x48xf32, #tpu.memory_space<vmem>>, vector<2x48xf32>
    %cst_17 = arith.constant dense<0.000000e+00> : vector<2x48xf32>
    %31 = tpu.matmul %29, %7, %cst_17 {dimension_numbers = #tpu.dot_dimension_numbers<[1], [0], [0], [1], [0, 0, 1, 1], [], []>} : vector<2x16xf32>, vector<16x48xf32>, vector<2x48xf32> -> vector<2x48xf32>
    %32 = arith.addf %30, %31 : vector<2x48xf32>
    %33 = vector.extract_strided_slice %32 {offsets = [0, 0], sizes = [2, 16], strides = [1, 1]} : vector<2x48xf32> to vector<2x16xf32>
    %34 = arith.negf %33 : vector<2x16xf32>
    %35 = math.exp %34 : vector<2x16xf32>
    %cst_18 = arith.constant 1.000000e+00 : f32
    %36 = vector.broadcast %cst_18 : f32 to vector<2x16xf32>
    %37 = arith.addf %36, %35 : vector<2x16xf32>
    %38 = arith.divf %36, %37 : vector<2x16xf32>
    %39 = vector.extract_strided_slice %32 {offsets = [0, 16], sizes = [2, 16], strides = [1, 1]} : vector<2x48xf32> to vector<2x16xf32>
    %40 = arith.negf %39 : vector<2x16xf32>
    %41 = math.exp %40 : vector<2x16xf32>
    %cst_19 = arith.constant 1.000000e+00 : f32
    %42 = vector.broadcast %cst_19 : f32 to vector<2x16xf32>
    %43 = arith.addf %42, %41 : vector<2x16xf32>
    %44 = arith.divf %42, %43 : vector<2x16xf32>
    %45 = vector.extract_strided_slice %32 {offsets = [0, 32], sizes = [2, 16], strides = [1, 1]} : vector<2x48xf32> to vector<2x16xf32>
    %46 = vector.broadcast %8 : vector<1x16xf32> to vector<2x16xf32>
    %47 = arith.mulf %38, %46 : vector<2x16xf32>
    %48 = arith.addf %45, %47 : vector<2x16xf32>
    %49 = math.tanh %48 : vector<2x16xf32>
    %cst_20 = arith.constant 1.000000e+00 : f32
    %50 = vector.broadcast %cst_20 : f32 to vector<2x16xf32>
    %51 = arith.subf %50, %44 : vector<2x16xf32>
    %52 = arith.mulf %51, %49 : vector<2x16xf32>
    %c4 = arith.constant 4 : index
    %c0_21 = arith.constant 0 : index
    %53 = vector.load %arg11[%c4, %c0_21] : memref<6x48xf32, #tpu.memory_space<vmem>>, vector<2x48xf32>
    %cst_22 = arith.constant dense<0.000000e+00> : vector<2x48xf32>
    %54 = tpu.matmul %29, %7, %cst_22 {dimension_numbers = #tpu.dot_dimension_numbers<[1], [0], [0], [1], [0, 0, 1, 1], [], []>} : vector<2x16xf32>, vector<16x48xf32>, vector<2x48xf32> -> vector<2x48xf32>
    %55 = arith.addf %53, %54 : vector<2x48xf32>
    %56 = vector.extract_strided_slice %55 {offsets = [0, 0], sizes = [2, 16], strides = [1, 1]} : vector<2x48xf32> to vector<2x16xf32>
    %57 = arith.negf %56 : vector<2x16xf32>
    %58 = math.exp %57 : vector<2x16xf32>
    %cst_23 = arith.constant 1.000000e+00 : f32
    %59 = vector.broadcast %cst_23 : f32 to vector<2x16xf32>
    %60 = arith.addf %59, %58 : vector<2x16xf32>
    %61 = arith.divf %59, %60 : vector<2x16xf32>
    %62 = vector.extract_strided_slice %55 {offsets = [0, 16], sizes = [2, 16], strides = [1, 1]} : vector<2x48xf32> to vector<2x16xf32>
    %63 = arith.negf %62 : vector<2x16xf32>
    %64 = math.exp %63 : vector<2x16xf32>
    %cst_24 = arith.constant 1.000000e+00 : f32
    %65 = vector.broadcast %cst_24 : f32 to vector<2x16xf32>
    %66 = arith.addf %65, %64 : vector<2x16xf32>
    %67 = arith.divf %65, %66 : vector<2x16xf32>
    %68 = vector.extract_strided_slice %55 {offsets = [0, 32], sizes = [2, 16], strides = [1, 1]} : vector<2x48xf32> to vector<2x16xf32>
    %69 = vector.broadcast %8 : vector<1x16xf32> to vector<2x16xf32>
    %70 = arith.mulf %61, %69 : vector<2x16xf32>
    %71 = arith.addf %68, %70 : vector<2x16xf32>
    %72 = math.tanh %71 : vector<2x16xf32>
    %cst_25 = arith.constant 1.000000e+00 : f32
    %73 = vector.broadcast %cst_25 : f32 to vector<2x16xf32>
    %74 = arith.subf %73, %67 : vector<2x16xf32>
    %75 = arith.mulf %74, %72 : vector<2x16xf32>
    %c4_26 = arith.constant 4 : index
    %c0_27 = arith.constant 0 : index
    %76 = vector.load %arg11[%c4_26, %c0_27] : memref<6x48xf32, #tpu.memory_space<vmem>>, vector<2x48xf32>
    %77 = vector.extract_strided_slice %76 {offsets = [0, 0], sizes = [2, 16], strides = [1, 1]} : vector<2x48xf32> to vector<2x16xf32>
    %78 = arith.negf %77 : vector<2x16xf32>
    %79 = math.exp %78 : vector<2x16xf32>
    %cst_28 = arith.constant 1.000000e+00 : f32
    %80 = vector.broadcast %cst_28 : f32 to vector<2x16xf32>
    %81 = arith.addf %80, %79 : vector<2x16xf32>
    %82 = arith.divf %80, %81 : vector<2x16xf32>
    %83 = vector.extract_strided_slice %76 {offsets = [0, 16], sizes = [2, 16], strides = [1, 1]} : vector<2x48xf32> to vector<2x16xf32>
    %84 = arith.negf %83 : vector<2x16xf32>
    %85 = math.exp %84 : vector<2x16xf32>
    %cst_29 = arith.constant 1.000000e+00 : f32
    %86 = vector.broadcast %cst_29 : f32 to vector<2x16xf32>
    %87 = arith.addf %86, %85 : vector<2x16xf32>
    %88 = arith.divf %86, %87 : vector<2x16xf32>
    %89 = vector.extract_strided_slice %76 {offsets = [0, 32], sizes = [2, 16], strides = [1, 1]} : vector<2x48xf32> to vector<2x16xf32>
    %90 = vector.broadcast %8 : vector<1x16xf32> to vector<2x16xf32>
    %91 = arith.mulf %82, %90 : vector<2x16xf32>
    %92 = arith.addf %89, %91 : vector<2x16xf32>
    %93 = math.tanh %92 : vector<2x16xf32>
    %cst_30 = arith.constant 1.000000e+00 : f32
    %94 = vector.broadcast %cst_30 : f32 to vector<2x16xf32>
    %95 = arith.subf %94, %88 : vector<2x16xf32>
    %96 = arith.mulf %95, %93 : vector<2x16xf32>
    %c2_31 = arith.constant 2 : index
    %c0_32 = arith.constant 0 : index
    %97 = vector.load %arg11[%c2_31, %c0_32] : memref<6x48xf32, #tpu.memory_space<vmem>>, vector<2x48xf32>
    %cst_33 = arith.constant dense<0.000000e+00> : vector<2x48xf32>
    %98 = tpu.matmul %96, %7, %cst_33 {dimension_numbers = #tpu.dot_dimension_numbers<[1], [0], [0], [1], [0, 0, 1, 1], [], []>} : vector<2x16xf32>, vector<16x48xf32>, vector<2x48xf32> -> vector<2x48xf32>
    %99 = arith.addf %97, %98 : vector<2x48xf32>
    %100 = vector.extract_strided_slice %99 {offsets = [0, 0], sizes = [2, 16], strides = [1, 1]} : vector<2x48xf32> to vector<2x16xf32>
    %101 = arith.negf %100 : vector<2x16xf32>
    %102 = math.exp %101 : vector<2x16xf32>
    %cst_34 = arith.constant 1.000000e+00 : f32
    %103 = vector.broadcast %cst_34 : f32 to vector<2x16xf32>
    %104 = arith.addf %103, %102 : vector<2x16xf32>
    %105 = arith.divf %103, %104 : vector<2x16xf32>
    %106 = vector.extract_strided_slice %99 {offsets = [0, 16], sizes = [2, 16], strides = [1, 1]} : vector<2x48xf32> to vector<2x16xf32>
    %107 = arith.negf %106 : vector<2x16xf32>
    %108 = math.exp %107 : vector<2x16xf32>
    %cst_35 = arith.constant 1.000000e+00 : f32
    %109 = vector.broadcast %cst_35 : f32 to vector<2x16xf32>
    %110 = arith.addf %109, %108 : vector<2x16xf32>
    %111 = arith.divf %109, %110 : vector<2x16xf32>
    %112 = vector.extract_strided_slice %99 {offsets = [0, 32], sizes = [2, 16], strides = [1, 1]} : vector<2x48xf32> to vector<2x16xf32>
    %113 = vector.broadcast %8 : vector<1x16xf32> to vector<2x16xf32>
    %114 = arith.mulf %105, %113 : vector<2x16xf32>
    %115 = arith.addf %112, %114 : vector<2x16xf32>
    %116 = math.tanh %115 : vector<2x16xf32>
    %cst_36 = arith.constant 1.000000e+00 : f32
    %117 = vector.broadcast %cst_36 : f32 to vector<2x16xf32>
    %118 = arith.subf %117, %111 : vector<2x16xf32>
    %119 = arith.mulf %118, %116 : vector<2x16xf32>
    %c0_37 = arith.constant 0 : index
    %c0_38 = arith.constant 0 : index
    %120 = vector.load %arg11[%c0_37, %c0_38] : memref<6x48xf32, #tpu.memory_space<vmem>>, vector<2x48xf32>
    %cst_39 = arith.constant dense<0.000000e+00> : vector<2x48xf32>
    %121 = tpu.matmul %96, %7, %cst_39 {dimension_numbers = #tpu.dot_dimension_numbers<[1], [0], [0], [1], [0, 0, 1, 1], [], []>} : vector<2x16xf32>, vector<16x48xf32>, vector<2x48xf32> -> vector<2x48xf32>
    %122 = arith.addf %120, %121 : vector<2x48xf32>
    %123 = vector.extract_strided_slice %122 {offsets = [0, 0], sizes = [2, 16], strides = [1, 1]} : vector<2x48xf32> to vector<2x16xf32>
    %124 = arith.negf %123 : vector<2x16xf32>
    %125 = math.exp %124 : vector<2x16xf32>
    %cst_40 = arith.constant 1.000000e+00 : f32
    %126 = vector.broadcast %cst_40 : f32 to vector<2x16xf32>
    %127 = arith.addf %126, %125 : vector<2x16xf32>
    %128 = arith.divf %126, %127 : vector<2x16xf32>
    %129 = vector.extract_strided_slice %122 {offsets = [0, 16], sizes = [2, 16], strides = [1, 1]} : vector<2x48xf32> to vector<2x16xf32>
    %130 = arith.negf %129 : vector<2x16xf32>
    %131 = math.exp %130 : vector<2x16xf32>
    %cst_41 = arith.constant 1.000000e+00 : f32
    %132 = vector.broadcast %cst_41 : f32 to vector<2x16xf32>
    %133 = arith.addf %132, %131 : vector<2x16xf32>
    %134 = arith.divf %132, %133 : vector<2x16xf32>
    %135 = vector.extract_strided_slice %122 {offsets = [0, 32], sizes = [2, 16], strides = [1, 1]} : vector<2x48xf32> to vector<2x16xf32>
    %136 = vector.broadcast %8 : vector<1x16xf32> to vector<2x16xf32>
    %137 = arith.mulf %128, %136 : vector<2x16xf32>
    %138 = arith.addf %135, %137 : vector<2x16xf32>
    %139 = math.tanh %138 : vector<2x16xf32>
    %cst_42 = arith.constant 1.000000e+00 : f32
    %140 = vector.broadcast %cst_42 : f32 to vector<2x16xf32>
    %141 = arith.subf %140, %134 : vector<2x16xf32>
    %142 = arith.mulf %141, %139 : vector<2x16xf32>
    %c0_43 = arith.constant 0 : index
    %c0_44 = arith.constant 0 : index
    %143 = vector.load %arg10[%c0_43, %c0_44] : memref<2x96xf32, #tpu.memory_space<vmem>>, vector<2x16xf32>
    tpu.vector_store %arg10[%c0_43, %c0_44], %96 {strides = array<i32>} : memref<2x96xf32, #tpu.memory_space<vmem>>, vector<2x16xf32>,
    %c0_45 = arith.constant 0 : index
    %c16 = arith.constant 16 : index
    %144 = vector.load %arg10[%c0_45, %c16] : memref<2x96xf32, #tpu.memory_space<vmem>>, vector<2x16xf32>
    tpu.vector_store %arg10[%c0_45, %c16], %119 {strides = array<i32>} : memref<2x96xf32, #tpu.memory_space<vmem>>, vector<2x16xf32>,
    %c0_46 = arith.constant 0 : index
    %c32 = arith.constant 32 : index
    %145 = vector.load %arg10[%c0_46, %c32] : memref<2x96xf32, #tpu.memory_space<vmem>>, vector<2x16xf32>
    tpu.vector_store %arg10[%c0_46, %c32], %142 {strides = array<i32>} : memref<2x96xf32, #tpu.memory_space<vmem>>, vector<2x16xf32>,
    %c0_47 = arith.constant 0 : index
    %c48 = arith.constant 48 : index
    %146 = vector.load %arg10[%c0_47, %c48] : memref<2x96xf32, #tpu.memory_space<vmem>>, vector<2x16xf32>
    tpu.vector_store %arg10[%c0_47, %c48], %29 {strides = array<i32>} : memref<2x96xf32, #tpu.memory_space<vmem>>, vector<2x16xf32>,
    %c0_48 = arith.constant 0 : index
    %c64 = arith.constant 64 : index
    %147 = vector.load %arg10[%c0_48, %c64] : memref<2x96xf32, #tpu.memory_space<vmem>>, vector<2x16xf32>
    tpu.vector_store %arg10[%c0_48, %c64], %52 {strides = array<i32>} : memref<2x96xf32, #tpu.memory_space<vmem>>, vector<2x16xf32>,
    %c0_49 = arith.constant 0 : index
    %c80 = arith.constant 80 : index
    %148 = vector.load %arg10[%c0_49, %c80] : memref<2x96xf32, #tpu.memory_space<vmem>>, vector<2x16xf32>
    tpu.vector_store %arg10[%c0_49, %c80], %75 {strides = array<i32>} : memref<2x96xf32, #tpu.memory_space<vmem>>, vector<2x16xf32>,
    %c0_50 = arith.constant 0 : index
    %c0_51 = arith.constant 0 : index
    %149 = vector.load %arg10[%c0_50, %c0_51] : memref<2x96xf32, #tpu.memory_space<vmem>>, vector<2x96xf32>
    %c0_52 = arith.constant 0 : index
    %c0_53 = arith.constant 0 : index
    %150 = vector.load %arg5[%c0_52, %c0_53] : memref<96x32xf32, #tpu.memory_space<vmem>>, vector<96x32xf32>
    %cst_54 = arith.constant dense<0.000000e+00> : vector<2x32xf32>
    %151 = tpu.matmul %149, %150, %cst_54 {dimension_numbers = #tpu.dot_dimension_numbers<[1], [0], [0], [1], [0, 0, 1, 1], [], []>} : vector<2x96xf32>, vector<96x32xf32>, vector<2x32xf32> -> vector<2x32xf32>
    %c0_55 = arith.constant 0 : index
    %c0_56 = arith.constant 0 : index
    %152 = vector.load %arg6[%c0_55, %c0_56] : memref<1x32xf32, #tpu.memory_space<vmem>>, vector<1x32xf32>
    %153 = vector.broadcast %152 : vector<1x32xf32> to vector<2x32xf32>
    %154 = arith.addf %151, %153 : vector<2x32xf32>
    %cst_57 = arith.constant 0.000000e+00 : f32
    %155 = vector.broadcast %cst_57 : f32 to vector<2x32xf32>
    %156 = arith.maximumf %154, %155 : vector<2x32xf32>
    %c0_58 = arith.constant 0 : index
    %c0_59 = arith.constant 0 : index
    %157 = vector.load %arg7[%c0_58, %c0_59] : memref<32x8xf32, #tpu.memory_space<vmem>>, vector<32x8xf32>
    %cst_60 = arith.constant dense<0.000000e+00> : vector<2x8xf32>
    %158 = tpu.matmul %156, %157, %cst_60 {dimension_numbers = #tpu.dot_dimension_numbers<[1], [0], [0], [1], [0, 0, 1, 1], [], []>} : vector<2x32xf32>, vector<32x8xf32>, vector<2x8xf32> -> vector<2x8xf32>
    %c0_61 = arith.constant 0 : index
    %c0_62 = arith.constant 0 : index
    %159 = vector.load %arg8[%c0_61, %c0_62] : memref<1x8xf32, #tpu.memory_space<vmem>>, vector<1x8xf32>
    %160 = vector.broadcast %159 : vector<1x8xf32> to vector<2x8xf32>
    %161 = arith.addf %158, %160 : vector<2x8xf32>
    %162 = arith.negf %161 : vector<2x8xf32>
    %163 = math.exp %162 : vector<2x8xf32>
    %cst_63 = arith.constant 1.000000e+00 : f32
    %164 = vector.broadcast %cst_63 : f32 to vector<2x8xf32>
    %165 = arith.addf %164, %163 : vector<2x8xf32>
    %166 = arith.divf %164, %165 : vector<2x8xf32>
    %c0_64 = arith.constant 0 : index
    %c0_65 = arith.constant 0 : index
    %167 = vector.load %arg9[%c0_64, %c0_65] : memref<2x8xf32, #tpu.memory_space<vmem>>, vector<2x8xf32>
    tpu.vector_store %arg9[%c0_64, %c0_65], %166 {strides = array<i32>} : memref<2x8xf32, #tpu.memory_space<vmem>>, vector<2x8xf32>,
    return
  }
}

</mosaic_0001>

<llo_original>
// kernel: tpu_custom_call.1
$region0: #{tpu_custom_call.1}
  #allocation0 [shape = 'u32[]', space=smem, size = 0x4, offset = 0x4, fixed_abs, tag = 'smem constant byte address 0x4 - core index']
  #allocation1 [shape = 'u32[144,128]{1,0:T(1,128)}', space=vmem, size = 0x12000, scoped, tag = 'internal scratch']
  #allocation2 [shape = 'f32[6,48]{1,0:T(8,128)}', space=vmem, size = 0x1000, scoped, tag = 'scratch operand']
  %s0 = inlined_call_operand.vmem [shape: f32[6,8], index: 0, kind: input, shape index: {}]
  %s1 = inlined_call_operand.vmem [shape: f32[8,48], index: 1, kind: input, shape index: {}]
  %s2 = inlined_call_operand.vmem [shape: f32[16,48], index: 2, kind: input, shape index: {}]
  %s3 = inlined_call_operand.vmem [shape: f32[1,48], index: 3, kind: input, shape index: {}]
  %s4 = inlined_call_operand.vmem [shape: f32[1,16], index: 4, kind: input, shape index: {}]
  %s5 = inlined_call_operand.vmem [shape: f32[96,32], index: 5, kind: input, shape index: {}]
  %s6 = inlined_call_operand.vmem [shape: f32[1,32], index: 6, kind: input, shape index: {}]
  %s7 = inlined_call_operand.vmem [shape: f32[32,8], index: 7, kind: input, shape index: {}]
  %s8 = inlined_call_operand.vmem [shape: f32[1,8], index: 8, kind: input, shape index: {}]
  %s9 = inlined_call_operand.hbm [shape: f32[2,8], index: 9, kind: output, shape index: {0}]
  %s10 = inlined_call_operand.hbm [shape: f32[2,96], index: 10, kind: output, shape index: {1}]
  %11 = xla_tuple %s9, %s10
  %s12 = sld [smem:[#allocation0]]
  $region54: #{tpu_custom_call.1} parent=0
    _
  %s14 = ssub.s32 1, %s12
  %s15 = scalar_select 0, %s14, %s12
  $region1: #{tpu_custom_call.1} parent=0
    #allocation3 [shape = 'u8[1024]{0}', space=vmem, size = 0x400, scoped, tag = 'output window, operand 0, single buffered']
    #allocation4 [shape = 's32[1]{0}', space=sflag, size = 0x4, scoped, tag = 'scoped memory for tpu_custom_call.1']
    #allocation5 [shape = 'u8[1024]{0}', space=vmem, size = 0x400, scoped, tag = 'output window, operand 1, single buffered']
    #allocation6 [shape = 's32[1]{0}', space=sflag, size = 0x4, scoped, tag = 'scoped memory for tpu_custom_call.1']
    %16 = vsyncpa [#allocation4], 0
    %17 = vsyncpa [#allocation6], 0
    // Predicated region
    $region2: #{tpu_custom_call.1} parent=1 // pred_check
      _
    $region3: #{tpu_custom_call.1} parent=1 // pred_check_branch
      %19 = sbr.rel (0) target = $region5
    $region4: #{tpu_custom_call.1} parent=1 // pred_region
      _
    $region5: #{tpu_custom_call.1} parent=1 // pred_fallthru
      _
    // Predicated region
    $region6: #{tpu_custom_call.1} parent=1 // pred_check
      _
    $region7: #{tpu_custom_call.1} parent=1 // pred_check_branch
      %21 = sbr.rel (0) target = $region9
    $region8: #{tpu_custom_call.1} parent=1 // pred_region
      _
    $region9: #{tpu_custom_call.1} parent=1 // pred_fallthru
      _
    // Predicated region
    $region10: #{tpu_custom_call.1} parent=1 // pred_check
      _
    $region11: #{tpu_custom_call.1} parent=1 // pred_check_branch
      %23 = sbr.rel (0) target = $region13
    $region12: #{tpu_custom_call.1} parent=1 // pred_region
      _
    $region13: #{tpu_custom_call.1} parent=1 // pred_fallthru
      _
    // Predicated region
    $region14: #{tpu_custom_call.1} parent=1 // pred_check
      _
    $region15: #{tpu_custom_call.1} parent=1 // pred_check_branch
      %25 = sbr.rel (0) target = $region17
    $region16: #{tpu_custom_call.1} parent=1 // pred_region
      _
    $region17: #{tpu_custom_call.1} parent=1 // pred_fallthru
      _
    // Predicated region
    $region18: #{tpu_custom_call.1} parent=1 // pred_check
      _
    $region19: #{tpu_custom_call.1} parent=1 // pred_check_branch
      %27 = sbr.rel (0) target = $region21
    $region20: #{tpu_custom_call.1} parent=1 // pred_region
      _
    $region21: #{tpu_custom_call.1} parent=1 // pred_fallthru
      _
    // Predicated region
    $region22: #{tpu_custom_call.1} parent=1 // pred_check
      _
    $region23: #{tpu_custom_call.1} parent=1 // pred_check_branch
      %29 = sbr.rel (0) target = $region25
    $region24: #{tpu_custom_call.1} parent=1 // pred_region
      _
    $region25: #{tpu_custom_call.1} parent=1 // pred_fallthru
      _
    // Predicated region
    $region26: #{tpu_custom_call.1} parent=1 // pred_check
      _
    $region27: #{tpu_custom_call.1} parent=1 // pred_check_branch
      %31 = sbr.rel (0) target = $region29
    $region28: #{tpu_custom_call.1} parent=1 // pred_region
      _
    $region29: #{tpu_custom_call.1} parent=1 // pred_fallthru
      _
    // Predicated region
    $region30: #{tpu_custom_call.1} parent=1 // pred_check
      _
    $region31: #{tpu_custom_call.1} parent=1 // pred_check_branch
      %33 = sbr.rel (0) target = $region33
    $region32: #{tpu_custom_call.1} parent=1 // pred_region
      _
    $region33: #{tpu_custom_call.1} parent=1 // pred_fallthru
      _
    // Predicated region
    $region34: #{tpu_custom_call.1} parent=1 // pred_check
      _
    $region35: #{tpu_custom_call.1} parent=1 // pred_check_branch
      %35 = sbr.rel (0) target = $region37
    $region36: #{tpu_custom_call.1} parent=1 // pred_region
      _
    $region37: #{tpu_custom_call.1} parent=1 // pred_fallthru
      _
    %v36 = vld [vmem:[%s0] sm:$0x3f]
    %v37 = vld [vmem:[%s1] sm:$0xff]
    %v38 = vld [vmem:[%s3] sm:$0x1]
    %v40 = vlaneseq
    %v41 = vshrl.u32 %v40, 7
    %v42 = vsub.s32 0, %v41
    %v43 = vrot.slane %v38, %v42
    %vm45 = vcmask 64512
    %v47 = vsel %vm45, %v36, 0
    %49 = vmatprep.subr.mxu0 0.0
    %50 = vmatpush1.msra.mxu0 0.0
    %51 = vmatprep.subr.mxu0 0.0
    %52 = vmatpush1.msra.mxu0 0.0
    %53 = vmatprep.subr.mxu0 0.0
    %54 = vmatpush1.msra.mxu0 0.0
    %55 = vmatprep.subr.mxu0 0.0
    %56 = vmatpush1.msra.mxu0 0.0
    %57 = vmatprep.subr.mxu0 0.0
    %58 = vmatpush1.msra.mxu0 0.0
    %59 = vmatprep.subr.mxu0 0.0
    %60 = vmatpush1.msra.mxu0 0.0
    %61 = vmatprep.subr.mxu0 0.0
    %62 = vmatpush1.msra.mxu0 0.0
    %63 = vmatprep.subr.mxu0 0.0
    %64 = vmatpush1.msra.mxu0 0.0
    %65 = vmatprep.subr.mxu0 0.0
    %66 = vmatpush1.msra.mxu0 0.0
    %67 = vmatprep.subr.mxu0 0.0
    %68 = vmatpush1.msra.mxu0 0.0
    %69 = vmatprep.subr.mxu0 0.0
    %70 = vmatpush1.msra.mxu0 0.0
    %71 = vmatprep.subr.mxu0 0.0
    %72 = vmatpush1.msra.mxu0 0.0
    %73 = vmatprep.subr.mxu0 0.0
    %74 = vmatpush1.msra.mxu0 0.0
    %75 = vmatprep.subr.mxu0 0.0
    %76 = vmatpush1.msra.mxu0 0.0
    %77 = vmatprep.subr.mxu0 0.0
    %78 = vmatpush1.msra.mxu0 0.0
    %79 = vmatprep.subr.mxu0 0.0
    %80 = vmatpush1.msra.mxu0 %v37
    %81 = vmatprep.subr.mxu0 0.0
    %82 = vmatpush2.msra.mxu0 0.0
    %83 = vmatprep.subr.mxu0 0.0
    %84 = vmatpush2.msra.mxu0 0.0
    %85 = vmatprep.subr.mxu0 0.0
    %86 = vmatpush2.msra.mxu0 0.0
    %87 = vmatprep.subr.mxu0 0.0
    %88 = vmatpush2.msra.mxu0 0.0
    %89 = vmatprep.subr.mxu0 0.0
    %90 = vmatpush2.msra.mxu0 0.0
    %91 = vmatprep.subr.mxu0 0.0
    %92 = vmatpush2.msra.mxu0 0.0
    %93 = vmatprep.subr.mxu0 0.0
    %94 = vmatpush2.msra.mxu0 0.0
    %95 = vmatprep.subr.mxu0 0.0
    %96 = vmatpush2.msra.mxu0 0.0
    %97 = vmatprep.subr.mxu0 0.0
    %98 = vmatpush2.msra.mxu0 0.0
    %99 = vmatprep.subr.mxu0 0.0
    %100 = vmatpush2.msra.mxu0 0.0
    %101 = vmatprep.subr.mxu0 0.0
    %102 = vmatpush2.msra.mxu0 0.0
    %103 = vmatprep.subr.mxu0 0.0
    %104 = vmatpush2.msra.mxu0 0.0
    %105 = vmatprep.subr.mxu0 0.0
    %106 = vmatpush2.msra.mxu0 0.0
    %107 = vmatprep.subr.mxu0 0.0
    %108 = vmatpush2.msra.mxu0 0.0
    %109 = vmatprep.subr.mxu0 0.0
    %110 = vmatpush2.msra.mxu0 0.0
    %111 = vmatprep.subr.mxu0 0.0
    %112 = vmatpush2.msra.mxu0 0.0
    %113 = vmatprep.mubr.f32.mxu0 0.0
    %114 = vmatmul.mubr.f32.gmra.mxu0 %v47
    %v115 = vpop.f32.mrf.mxu0
    %v116 = vadd.f32 %v43, %v115
    %v117 = vpop.f32.mrf.mxu0
    %118 = vdwg.mxu0
    %vm119 = vcmask 390144
    %120 = vst.msk [vmem:[#allocation2] sm:$0x3f] %vm119, %v116
    %v121 = vld [vmem:[%s2] sm:$0xff]
    %v122 = vld [vmem:[%s2 + $0x8] sm:$0xff]
    %v123 = vld [vmem:[%s4] sm:$0x1]
    %v124 = vld [vmem:[#allocation2] sm:$0x3]
    %v125 = vxor.u32 %v124, 2147483648
    %v126 = vmul.f32 %v125, 1.442695
    %v127 = vpow.pop %v126
    %v128 = vadd.f32 %v127, 1.0
    %v129 = vrcp.pop %v128
    %v130 = vmul.f32 1.0, %v129
    %v132 = vlaneseq
    %v133 = vshrl.u32 %v132, 7
    %v134 = vsub.s32 0, %v133
    %v135 = vrot.slane %v123, %v134
    %v137 = vmul.f32 %v130, %v135
    %139 = vrot.lane.b32.xlu0 %v137, 32
    %v140 = vpop.permute.xlu0 %139
    %v142 = vadd.f32 %v124, %v140
    %v143 = vtanh.pop %v142
    %v144 = vsub.f32 1.0, %v130
    %146 = vrot.lane.b32.xlu0 %v143, 112
    %v147 = vpop.permute.xlu0 %146
    %v149 = vmul.f32 %v144, %v147
    %v150 = vld [vmem:[#allocation2 + $0x2] sm:$0x3]
    %152 = vrot.lane.b32.xlu0 %v149, 112
    %v153 = vpop.permute.xlu0 %152
    %vm154 = vcmask 130048
    %v155 = vsel %vm154, %v153, 0
    %157 = vmatprep.subr.mxu0 0.0
    %158 = vmatpush1.msra.mxu0 0.0
    %159 = vmatprep.subr.mxu0 0.0
    %160 = vmatpush1.msra.mxu0 0.0
    %161 = vmatprep.subr.mxu0 0.0
    %162 = vmatpush1.msra.mxu0 0.0
    %163 = vmatprep.subr.mxu0 0.0
    %164 = vmatpush1.msra.mxu0 0.0
    %165 = vmatprep.subr.mxu0 0.0
    %166 = vmatpush1.msra.mxu0 0.0
    %167 = vmatprep.subr.mxu0 0.0
    %168 = vmatpush1.msra.mxu0 0.0
    %169 = vmatprep.subr.mxu0 0.0
    %170 = vmatpush1.msra.mxu0 0.0
    %171 = vmatprep.subr.mxu0 0.0
    %172 = vmatpush1.msra.mxu0 0.0
    %173 = vmatprep.subr.mxu0 0.0
    %174 = vmatpush1.msra.mxu0 0.0
    %175 = vmatprep.subr.mxu0 0.0
    %176 = vmatpush1.msra.mxu0 0.0
    %177 = vmatprep.subr.mxu0 0.0
    %178 = vmatpush1.msra.mxu0 0.0
    %179 = vmatprep.subr.mxu0 0.0
    %180 = vmatpush1.msra.mxu0 0.0
    %181 = vmatprep.subr.mxu0 0.0
    %182 = vmatpush1.msra.mxu0 0.0
    %183 = vmatprep.subr.mxu0 0.0
    %184 = vmatpush1.msra.mxu0 0.0
    %185 = vmatprep.subr.mxu0 0.0
    %186 = vmatpush1.msra.mxu0 %v122
    %187 = vmatprep.subr.mxu0 0.0
    %188 = vmatpush1.msra.mxu0 %v121
    %189 = vmatprep.subr.mxu0 0.0
    %190 = vmatpush2.msra.mxu0 0.0
    %191 = vmatprep.subr.mxu0 0.0
    %192 = vmatpush2.msra.mxu0 0.0
    %193 = vmatprep.subr.mxu0 0.0
    %194 = vmatpush2.msra.mxu0 0.0
    %195 = vmatprep.subr.mxu0 0.0
    %196 = vmatpush2.msra.mxu0 0.0
    %197 = vmatprep.subr.mxu0 0.0
    %198 = vmatpush2.msra.mxu0 0.0
    %199 = vmatprep.subr.mxu0 0.0
    %200 = vmatpush2.msra.mxu0 0.0
    %201 = vmatprep.subr.mxu0 0.0
    %202 = vmatpush2.msra.mxu0 0.0
    %203 = vmatprep.subr.mxu0 0.0
    %204 = vmatpush2.msra.mxu0 0.0
    %205 = vmatprep.subr.mxu0 0.0
    %206 = vmatpush2.msra.mxu0 0.0
    %207 = vmatprep.subr.mxu0 0.0
    %208 = vmatpush2.msra.mxu0 0.0
    %209 = vmatprep.subr.mxu0 0.0
    %210 = vmatpush2.msra.mxu0 0.0
    %211 = vmatprep.subr.mxu0 0.0
    %212 = vmatpush2.msra.mxu0 0.0
    %213 = vmatprep.subr.mxu0 0.0
    %214 = vmatpush2.msra.mxu0 0.0
    %215 = vmatprep.subr.mxu0 0.0
    %216 = vmatpush2.msra.mxu0 0.0
    %217 = vmatprep.subr.mxu0 0.0
    %218 = vmatpush2.msra.mxu0 0.0
    %219 = vmatprep.subr.mxu0 0.0
    %220 = vmatpush2.msra.mxu0 0.0
    %221 = vmatprep.mubr.f32.mxu0 0.0
    %222 = vmatmul.mubr.f32.gmra.mxu0 %v155
    %v223 = vpop.f32.mrf.mxu0
    %v224 = vadd.f32 0.0, %v223
    %v225 = vpop.f32.mrf.mxu0
    %226 = vdwg.mxu0
    %v227 = vadd.f32 %v150, %v224
    %v228 = vxor.u32 %v227, 2147483648
    %v229 = vmul.f32 %v228, 1.442695
    %v230 = vpow.pop %v229
    %v231 = vadd.f32 %v230, 1.0
    %v232 = vrcp.pop %v231
    %v233 = vmul.f32 1.0, %v232
    %v234 = vmul.f32 %v233, %v135
    %236 = vrot.lane.b32.xlu0 %v234, 32
    %v237 = vpop.permute.xlu0 %236
    %v239 = vadd.f32 %v227, %v237
    %v240 = vtanh.pop %v239
    %v241 = vsub.f32 1.0, %v233
    %243 = vrot.lane.b32.xlu0 %v240, 112
    %v244 = vpop.permute.xlu0 %243
    %v246 = vmul.f32 %v241, %v244
    %v247 = vld [vmem:[#allocation2 + $0x4] sm:$0x3]
    %v248 = vadd.f32 %v247, %v224
    %v249 = vxor.u32 %v248, 2147483648
    %v250 = vmul.f32 %v249, 1.442695
    %v251 = vpow.pop %v250
    %v252 = vadd.f32 %v251, 1.0
    %v253 = vrcp.pop %v252
    %v254 = vmul.f32 1.0, %v253
    %v255 = vmul.f32 %v254, %v135
    %257 = vrot.lane.b32.xlu0 %v255, 32
    %v258 = vpop.permute.xlu0 %257
    %v260 = vadd.f32 %v248, %v258
    %v261 = vtanh.pop %v260
    %v262 = vsub.f32 1.0, %v254
    %264 = vrot.lane.b32.xlu0 %v261, 112
    %v265 = vpop.permute.xlu0 %264
    %v267 = vmul.f32 %v262, %v265
    %v268 = vxor.u32 %v247, 2147483648
    %v269 = vmul.f32 %v268, 1.442695
    %v270 = vpow.pop %v269
    %v271 = vadd.f32 %v270, 1.0
    %v272 = vrcp.pop %v271
    %v273 = vmul.f32 1.0, %v272
    %v274 = vmul.f32 %v273, %v135
    %276 = vrot.lane.b32.xlu0 %v274, 32
    %v277 = vpop.permute.xlu0 %276
    %v279 = vadd.f32 %v247, %v277
    %v280 = vtanh.pop %v279
    %v281 = vsub.f32 1.0, %v273
    %283 = vrot.lane.b32.xlu0 %v280, 112
    %v284 = vpop.permute.xlu0 %283
    %v286 = vmul.f32 %v281, %v284
    %288 = vrot.lane.b32.xlu0 %v286, 112
    %v289 = vpop.permute.xlu0 %288
    %v290 = vsel %vm154, %v289, 0
    %292 = vmatprep.subr.mxu0 0.0
    %293 = vmatpush1.msra.mxu0 0.0
    %294 = vmatprep.subr.mxu0 0.0
    %295 = vmatpush1.msra.mxu0 0.0
    %296 = vmatprep.subr.mxu0 0.0
    %297 = vmatpush1.msra.mxu0 0.0
    %298 = vmatprep.subr.mxu0 0.0
    %299 = vmatpush1.msra.mxu0 0.0
    %300 = vmatprep.subr.mxu0 0.0
    %301 = vmatpush1.msra.mxu0 0.0
    %302 = vmatprep.subr.mxu0 0.0
    %303 = vmatpush1.msra.mxu0 0.0
    %304 = vmatprep.subr.mxu0 0.0
    %305 = vmatpush1.msra.mxu0 0.0
    %306 = vmatprep.subr.mxu0 0.0
    %307 = vmatpush1.msra.mxu0 0.0
    %308 = vmatprep.subr.mxu0 0.0
    %309 = vmatpush1.msra.mxu0 0.0
    %310 = vmatprep.subr.mxu0 0.0
    %311 = vmatpush1.msra.mxu0 0.0
    %312 = vmatprep.subr.mxu0 0.0
    %313 = vmatpush1.msra.mxu0 0.0
    %314 = vmatprep.subr.mxu0 0.0
    %315 = vmatpush1.msra.mxu0 0.0
    %316 = vmatprep.subr.mxu0 0.0
    %317 = vmatpush1.msra.mxu0 0.0
    %318 = vmatprep.subr.mxu0 0.0
    %319 = vmatpush1.msra.mxu0 0.0
    %320 = vmatprep.subr.mxu0 0.0
    %321 = vmatpush1.msra.mxu0 %v122
    %322 = vmatprep.subr.mxu0 0.0
    %323 = vmatpush1.msra.mxu0 %v121
    %324 = vmatprep.subr.mxu0 0.0
    %325 = vmatpush2.msra.mxu0 0.0
    %326 = vmatprep.subr.mxu0 0.0
    %327 = vmatpush2.msra.mxu0 0.0
    %328 = vmatprep.subr.mxu0 0.0
    %329 = vmatpush2.msra.mxu0 0.0
    %330 = vmatprep.subr.mxu0 0.0
    %331 = vmatpush2.msra.mxu0 0.0
    %332 = vmatprep.subr.mxu0 0.0
    %333 = vmatpush2.msra.mxu0 0.0
    %334 = vmatprep.subr.mxu0 0.0
    %335 = vmatpush2.msra.mxu0 0.0
    %336 = vmatprep.subr.mxu0 0.0
    %337 = vmatpush2.msra.mxu0 0.0
    %338 = vmatprep.subr.mxu0 0.0
    %339 = vmatpush2.msra.mxu0 0.0
    %340 = vmatprep.subr.mxu0 0.0
    %341 = vmatpush2.msra.mxu0 0.0
    %342 = vmatprep.subr.mxu0 0.0
    %343 = vmatpush2.msra.mxu0 0.0
    %344 = vmatprep.subr.mxu0 0.0
    %345 = vmatpush2.msra.mxu0 0.0
    %346 = vmatprep.subr.mxu0 0.0
    %347 = vmatpush2.msra.mxu0 0.0
    %348 = vmatprep.subr.mxu0 0.0
    %349 = vmatpush2.msra.mxu0 0.0
    %350 = vmatprep.subr.mxu0 0.0
    %351 = vmatpush2.msra.mxu0 0.0
    %352 = vmatprep.subr.mxu0 0.0
    %353 = vmatpush2.msra.mxu0 0.0
    %354 = vmatprep.subr.mxu0 0.0
    %355 = vmatpush2.msra.mxu0 0.0
    %356 = vmatprep.mubr.f32.mxu0 0.0
    %357 = vmatmul.mubr.f32.gmra.mxu0 %v290
    %v358 = vpop.f32.mrf.mxu0
    %v359 = vadd.f32 0.0, %v358
    %v360 = vpop.f32.mrf.mxu0
    %361 = vdwg.mxu0
    %v362 = vadd.f32 %v150, %v359
    %v363 = vxor.u32 %v362, 2147483648
    %v364 = vmul.f32 %v363, 1.442695
    %v365 = vpow.pop %v364
    %v366 = vadd.f32 %v365, 1.0
    %v367 = vrcp.pop %v366
    %v368 = vmul.f32 1.0, %v367
    %v369 = vmul.f32 %v368, %v135
    %371 = vrot.lane.b32.xlu0 %v369, 32
    %v372 = vpop.permute.xlu0 %371
    %v374 = vadd.f32 %v362, %v372
    %v375 = vtanh.pop %v374
    %v376 = vsub.f32 1.0, %v368
    %378 = vrot.lane.b32.xlu0 %v375, 112
    %v379 = vpop.permute.xlu0 %378
    %v381 = vmul.f32 %v376, %v379
    %v382 = vadd.f32 %v124, %v359
    %v383 = vxor.u32 %v382, 2147483648
    %v384 = vmul.f32 %v383, 1.442695
    %v385 = vpow.pop %v384
    %v386 = vadd.f32 %v385, 1.0
    %v387 = vrcp.pop %v386
    %v388 = vmul.f32 1.0, %v387
    %v389 = vmul.f32 %v388, %v135
    %391 = vrot.lane.b32.xlu0 %v389, 32
    %v392 = vpop.permute.xlu0 %391
    %v394 = vadd.f32 %v382, %v392
    %v395 = vtanh.pop %v394
    %v396 = vsub.f32 1.0, %v388
    %398 = vrot.lane.b32.xlu0 %v395, 112
    %v399 = vpop.permute.xlu0 %398
    %v401 = vmul.f32 %v396, %v399
    %vm403 = vcmask 123904
    %404 = vst.msk [vmem:[#allocation5] sm:$0x3] %vm403, %v289
    %vm405 = vcmask 255104
    %406 = vst.msk [vmem:[#allocation5] sm:$0x3] %vm405, %v381
    %408 = vrot.lane.b32.xlu0 %v401, 16
    %v409 = vpop.permute.xlu0 %408
    %vm411 = vcmask 386304
    %412 = vst.msk [vmem:[#allocation5] sm:$0x3] %vm411, %v409
    %413 = vrot.lane.b32.xlu0 %v149, 32
    %v414 = vpop.permute.xlu0 %413
    %vm416 = vcmask 517504
    %417 = vst.msk [vmem:[#allocation5] sm:$0x3] %vm416, %v414
    %419 = vrot.lane.b32.xlu0 %v246, 48
    %v420 = vpop.permute.xlu0 %419
    %vm422 = vcmask 648704
    %423 = vst.msk [vmem:[#allocation5] sm:$0x3] %vm422, %v420
    %425 = vrot.lane.b32.xlu0 %v267, 64
    %v426 = vpop.permute.xlu0 %425
    %vm428 = vcmask 779904
    %429 = vst.msk [vmem:[#allocation5] sm:$0x3] %vm428, %v426
    %v430 = vld [vmem:[#allocation5] sm:$0x3]
    %v431 = vld [vmem:[%s5] sm:$0xff]
    %v432 = vld [vmem:[%s5 + $0x8] sm:$0xff]
    %v433 = vld [vmem:[%s5 + $0x10] sm:$0xff]
    %v434 = vld [vmem:[%s5 + $0x18] sm:$0xff]
    %v435 = vld [vmem:[%s5 + $0x20] sm:$0xff]
    %v436 = vld [vmem:[%s5 + $0x28] sm:$0xff]
    %v437 = vld [vmem:[%s5 + $0x30] sm:$0xff]
    %v438 = vld [vmem:[%s5 + $0x38] sm:$0xff]
    %v439 = vld [vmem:[%s5 + $0x40] sm:$0xff]
    %v440 = vld [vmem:[%s5 + $0x48] sm:$0xff]
    %v441 = vld [vmem:[%s5 + $0x50] sm:$0xff]
    %v442 = vld [vmem:[%s5 + $0x58] sm:$0xff]
    %v443 = vld [vmem:[%s6] sm:$0x1]
    %v445 = vlaneseq
    %v446 = vshrl.u32 %v445, 7
    %v447 = vsub.s32 0, %v446
    %v448 = vrot.slane %v443, %v447
    %vm450 = vcmask 785408
    %v452 = vsel %vm450, %v430, 0
    %454 = vmatprep.subr.mxu0 0.0
    %455 = vmatpush1.msra.mxu0 0.0
    %456 = vmatprep.subr.mxu0 0.0
    %457 = vmatpush1.msra.mxu0 0.0
    %458 = vmatprep.subr.mxu0 0.0
    %459 = vmatpush1.msra.mxu0 0.0
    %460 = vmatprep.subr.mxu0 0.0
    %461 = vmatpush1.msra.mxu0 0.0
    %462 = vmatprep.subr.mxu0 0.0
    %463 = vmatpush1.msra.mxu0 %v442
    %464 = vmatprep.subr.mxu0 0.0
    %465 = vmatpush1.msra.mxu0 %v441
    %466 = vmatprep.subr.mxu0 0.0
    %467 = vmatpush1.msra.mxu0 %v440
    %468 = vmatprep.subr.mxu0 0.0
    %469 = vmatpush1.msra.mxu0 %v439
    %470 = vmatprep.subr.mxu0 0.0
    %471 = vmatpush1.msra.mxu0 %v438
    %472 = vmatprep.subr.mxu0 0.0
    %473 = vmatpush1.msra.mxu0 %v437
    %474 = vmatprep.subr.mxu0 0.0
    %475 = vmatpush1.msra.mxu0 %v436
    %476 = vmatprep.subr.mxu0 0.0
    %477 = vmatpush1.msra.mxu0 %v435
    %478 = vmatprep.subr.mxu0 0.0
    %479 = vmatpush1.msra.mxu0 %v434
    %480 = vmatprep.subr.mxu0 0.0
    %481 = vmatpush1.msra.mxu0 %v433
    %482 = vmatprep.subr.mxu0 0.0
    %483 = vmatpush1.msra.mxu0 %v432
    %484 = vmatprep.subr.mxu0 0.0
    %485 = vmatpush1.msra.mxu0 %v431
    %486 = vmatprep.subr.mxu0 0.0
    %487 = vmatpush2.msra.mxu0 0.0
    %488 = vmatprep.subr.mxu0 0.0
    %489 = vmatpush2.msra.mxu0 0.0
    %490 = vmatprep.subr.mxu0 0.0
    %491 = vmatpush2.msra.mxu0 0.0
    %492 = vmatprep.subr.mxu0 0.0
    %493 = vmatpush2.msra.mxu0 0.0
    %494 = vmatprep.subr.mxu0 0.0
    %495 = vmatpush2.msra.mxu0 0.0
    %496 = vmatprep.subr.mxu0 0.0
    %497 = vmatpush2.msra.mxu0 0.0
    %498 = vmatprep.subr.mxu0 0.0
    %499 = vmatpush2.msra.mxu0 0.0
    %500 = vmatprep.subr.mxu0 0.0
    %501 = vmatpush2.msra.mxu0 0.0
    %502 = vmatprep.subr.mxu0 0.0
    %503 = vmatpush2.msra.mxu0 0.0
    %504 = vmatprep.subr.mxu0 0.0
    %505 = vmatpush2.msra.mxu0 0.0
    %506 = vmatprep.subr.mxu0 0.0
    %507 = vmatpush2.msra.mxu0 0.0
    %508 = vmatprep.subr.mxu0 0.0
    %509 = vmatpush2.msra.mxu0 0.0
    %510 = vmatprep.subr.mxu0 0.0
    %511 = vmatpush2.msra.mxu0 0.0
    %512 = vmatprep.subr.mxu0 0.0
    %513 = vmatpush2.msra.mxu0 0.0
    %514 = vmatprep.subr.mxu0 0.0
    %515 = vmatpush2.msra.mxu0 0.0
    %516 = vmatprep.subr.mxu0 0.0
    %517 = vmatpush2.msra.mxu0 0.0
    %518 = vmatprep.mubr.f32.mxu0 0.0
    %519 = vmatmul.mubr.f32.gmra.mxu0 %v452
    %v520 = vpop.f32.mrf.mxu0
    %v521 = vadd.f32 %v448, %v520
    %v522 = vpop.f32.mrf.mxu0
    %523 = vdwg.mxu0
    %v524 = vmax.f32 %v521, 0.0
    %v525 = vld [vmem:[%s7] sm:$0xff]
    %v526 = vld [vmem:[%s7 + $0x8] sm:$0xff]
    %v527 = vld [vmem:[%s7 + $0x10] sm:$0xff]
    %v528 = vld [vmem:[%s7 + $0x18] sm:$0xff]
    %v529 = vld [vmem:[%s8] sm:$0x1]
    %v531 = vlaneseq
    %v532 = vshrl.u32 %v531, 7
    %v533 = vsub.s32 0, %v532
    %v534 = vrot.slane %v529, %v533
    %vm536 = vcmask 261120
    %v538 = vsel %vm536, %v524, 0
    %540 = vmatprep.subr.mxu0 0.0
    %541 = vmatpush1.msra.mxu0 0.0
    %542 = vmatprep.subr.mxu0 0.0
    %543 = vmatpush1.msra.mxu0 0.0
    %544 = vmatprep.subr.mxu0 0.0
    %545 = vmatpush1.msra.mxu0 0.0
    %546 = vmatprep.subr.mxu0 0.0
    %547 = vmatpush1.msra.mxu0 0.0
    %548 = vmatprep.subr.mxu0 0.0
    %549 = vmatpush1.msra.mxu0 0.0
    %550 = vmatprep.subr.mxu0 0.0
    %551 = vmatpush1.msra.mxu0 0.0
    %552 = vmatprep.subr.mxu0 0.0
    %553 = vmatpush1.msra.mxu0 0.0
    %554 = vmatprep.subr.mxu0 0.0
    %555 = vmatpush1.msra.mxu0 0.0
    %556 = vmatprep.subr.mxu0 0.0
    %557 = vmatpush1.msra.mxu0 0.0
    %558 = vmatprep.subr.mxu0 0.0
    %559 = vmatpush1.msra.mxu0 0.0
    %560 = vmatprep.subr.mxu0 0.0
    %561 = vmatpush1.msra.mxu0 0.0
    %562 = vmatprep.subr.mxu0 0.0
    %563 = vmatpush1.msra.mxu0 0.0
    %564 = vmatprep.subr.mxu0 0.0
    %565 = vmatpush1.msra.mxu0 %v528
    %566 = vmatprep.subr.mxu0 0.0
    %567 = vmatpush1.msra.mxu0 %v527
    %568 = vmatprep.subr.mxu0 0.0
    %569 = vmatpush1.msra.mxu0 %v526
    %570 = vmatprep.subr.mxu0 0.0
    %571 = vmatpush1.msra.mxu0 %v525
    %572 = vmatprep.subr.mxu0 0.0
    %573 = vmatpush2.msra.mxu0 0.0
    %574 = vmatprep.subr.mxu0 0.0
    %575 = vmatpush2.msra.mxu0 0.0
    %576 = vmatprep.subr.mxu0 0.0
    %577 = vmatpush2.msra.mxu0 0.0
    %578 = vmatprep.subr.mxu0 0.0
    %579 = vmatpush2.msra.mxu0 0.0
    %580 = vmatprep.subr.mxu0 0.0
    %581 = vmatpush2.msra.mxu0 0.0
    %582 = vmatprep.subr.mxu0 0.0
    %583 = vmatpush2.msra.mxu0 0.0
    %584 = vmatprep.subr.mxu0 0.0
    %585 = vmatpush2.msra.mxu0 0.0
    %586 = vmatprep.subr.mxu0 0.0
    %587 = vmatpush2.msra.mxu0 0.0
    %588 = vmatprep.subr.mxu0 0.0
    %589 = vmatpush2.msra.mxu0 0.0
    %590 = vmatprep.subr.mxu0 0.0
    %591 = vmatpush2.msra.mxu0 0.0
    %592 = vmatprep.subr.mxu0 0.0
    %593 = vmatpush2.msra.mxu0 0.0
    %594 = vmatprep.subr.mxu0 0.0
    %595 = vmatpush2.msra.mxu0 0.0
    %596 = vmatprep.subr.mxu0 0.0
    %597 = vmatpush2.msra.mxu0 0.0
    %598 = vmatprep.subr.mxu0 0.0
    %599 = vmatpush2.msra.mxu0 0.0
    %600 = vmatprep.subr.mxu0 0.0
    %601 = vmatpush2.msra.mxu0 0.0
    %602 = vmatprep.subr.mxu0 0.0
    %603 = vmatpush2.msra.mxu0 0.0
    %604 = vmatprep.mubr.f32.mxu0 0.0
    %605 = vmatmul.mubr.f32.gmra.mxu0 %v538
    %v606 = vpop.f32.mrf.mxu0
    %v607 = vadd.f32 %v534, %v606
    %v608 = vpop.f32.mrf.mxu0
    %609 = vdwg.mxu0
    %v610 = vxor.u32 %v607, 2147483648
    %v611 = vmul.f32 %v610, 1.442695
    %v612 = vpow.pop %v611
    %v613 = vadd.f32 %v612, 1.0
    %v614 = vrcp.pop %v613
    %v615 = vmul.f32 1.0, %v614
    %vm616 = vcmask 58368
    %617 = vst.msk [vmem:[#allocation3] sm:$0x3] %vm616, %v615
    // Predicated region
    $region38: #{tpu_custom_call.1} parent=1 // pred_check
      _
    $region39: #{tpu_custom_call.1} parent=1 // pred_check_branch
      %619 = sbr.rel (0) target = $region41
    $region40: #{tpu_custom_call.1} parent=1 // pred_region
      %s621 = ssub.s32 32, 32
      %622 = vsyncadd [#allocation4], %s621
      %s624 = sshll.u32 [#allocation3], 4
      %s625 = int_to_ptr.vmem [resolvable:$true] %s624
      %627 = dma.vmem_to_hbm [thread:$0]  %s625, 32, %s9, [#allocation4]
    $region41: #{tpu_custom_call.1} parent=1 // pred_fallthru
      _
    // Predicated region
    $region42: #{tpu_custom_call.1} parent=1 // pred_check
      _
    $region43: #{tpu_custom_call.1} parent=1 // pred_check_branch
      %629 = sbr.rel (0) target = $region45
    $region44: #{tpu_custom_call.1} parent=1 // pred_region
      %s631 = ssub.s32 32, 32
      %632 = vsyncadd [#allocation6], %s631
      %s634 = sshll.u32 [#allocation5], 4
      %s635 = int_to_ptr.vmem [resolvable:$true] %s634
      %637 = dma.vmem_to_hbm [thread:$0]  %s635, 32, %s10, [#allocation6]
    $region45: #{tpu_custom_call.1} parent=1 // pred_fallthru
      _
    // Predicated region
    $region46: #{tpu_custom_call.1} parent=1 // pred_check
      _
    $region47: #{tpu_custom_call.1} parent=1 // pred_check_branch
      %639 = sbr.rel (0) target = $region49
    $region48: #{tpu_custom_call.1} parent=1 // pred_region
      %640 = dma.done [#allocation4], 32
    $region49: #{tpu_custom_call.1} parent=1 // pred_fallthru
      _
    // Predicated region
    $region50: #{tpu_custom_call.1} parent=1 // pred_check
      _
    $region51: #{tpu_custom_call.1} parent=1 // pred_check_branch
      %642 = sbr.rel (0) target = $region53
    $region52: #{tpu_custom_call.1} parent=1 // pred_region
      %643 = dma.done [#allocation6], 32
    $region53: #{tpu_custom_call.1} parent=1 // pred_fallthru
      _
    %644 = vsyncpa [#allocation4], 1
    %645 = vsyncpa [#allocation6], 1

</llo_original>
